<compile_context>
chip_gen: v7x
topology: tpu7x:2x2x1
jax: 0.10.0
libtpu: 0.0.40
codegen_flags: <defaults>
</compile_context>

<pallas_src>
import functools

import jax
import jax.numpy as jnp
from jax.experimental import pallas as pl
from jax.experimental.pallas import tpu as pltpu


# ----------------------------- Upsample (nearest) -----------------------------


def _upsample_kernel(r_ref, x_ref, o_ref, *, exact_splits):
    r = r_ref[...]                      # (W, s*s*W) bf16 0/1 replication matrix
    x = x_ref[...]                      # (TR, W) input rows
    if exact_splits <= 1:
        # bf16 input: one bf16 matmul; each output = value * 1.0 (exact).
        y = jnp.dot(x, r, preferred_element_type=jnp.float32)
    else:
        # f32 / f16 input: exact bf16x3 split -> 3 bf16 matmuls summed in f32.
        xf = x.astype(jnp.float32)
        y = None
        for _ in range(exact_splits):
            part = xf.astype(jnp.bfloat16)
            xf = xf - part.astype(jnp.float32)
            d = jnp.dot(part, r, preferred_element_type=jnp.float32)
            y = d if y is None else y + d
    o_ref[...] = y.astype(o_ref.dtype)


def _choose_row_block(nch, w, sws, itemsize, budget_bytes=10 * 1024 * 1024):
    """Rows of the (N*C*H, W) view processed per grid step.

    Accounts for double-buffered input/output blocks (lane-padded) plus f32
    intermediates, so the sizing is safe under a 32 MiB scoped VMEM limit
    (and v7x's smaller physical VMEM).
    """
    lane = 128
    wp = -(-w // lane) * lane
    swsp = -(-sws // lane) * lane
    per_row = 2 * (wp + swsp) * itemsize + 6 * wp + 8 * swsp
    max_rows = max(8, budget_bytes // per_row)
    if max_rows >= nch:
        tr = nch                              # full dim: always a legal block
    else:
        tr = (max_rows // 8) * 8              # multiple of 8 (sublane rule)
    if nch >= 64:
        # Keep >= 4 grid steps so the DMA pipeline / megacore have work.
        quarter = ((-(-nch // 4)) + 7) // 8 * 8
        tr = min(tr, quarter)
    return max(min(tr, nch), 1)


def upsample_nearest(x: jax.Array, scale_factor=1) -> jax.Array:
    """Nearest-neighbor upsample of an NCHW tensor by an integer scale factor."""
    s = int(scale_factor)
    assert s == scale_factor and s >= 1, "integer scale factors only"
    if s == 1:
        return x                              # identity: skip the HBM round trip
    if x.ndim != 4:
        raise ValueError("expected NCHW input")
    if not jnp.issubdtype(x.dtype, jnp.floating):
        # TODO(synk): non-float dtypes fall back to XLA repeat (the MXU
        # replication trick is float-only).
        return jnp.repeat(jnp.repeat(x, s, axis=2), s, axis=3)

    N, C, H, W = x.shape
    Hs, Ws = H * s, W * s
    NCH = N * C * H
    sWs = s * Ws
    itemsize = jnp.dtype(x.dtype).itemsize

    # Constant 0/1 replication matrix: output column k copies input lane (k % Ws)//s.
    k = jnp.arange(sWs, dtype=jnp.int32)
    src = (k % Ws) // s
    repl = (jnp.arange(W, dtype=jnp.int32)[:, None] == src[None, :]).astype(jnp.bfloat16)

    x2d = x.reshape(NCH, W)                   # free (contiguous) reshape

    exact_splits = 1 if x.dtype == jnp.bfloat16 else 3
    tr = _choose_row_block(NCH, W, sWs, itemsize)
    grid = (pl.cdiv(NCH, tr),)

    cost = pl.CostEstimate(
        flops=2 * exact_splits * NCH * W * sWs,
        transcendentals=0,
        bytes_accessed=int(NCH * (W + sWs) * itemsize + 2 * W * sWs),
    )

    out2d = pl.pallas_call(
        functools.partial(_upsample_kernel, exact_splits=exact_splits),
        out_shape=jax.ShapeDtypeStruct((NCH, sWs), x.dtype),
        grid_spec=pltpu.PrefetchScalarGridSpec(
            num_scalar_prefetch=0,
            grid=grid,
            in_specs=[
                pl.BlockSpec((W, sWs), lambda i: (0, 0)),   # resident across steps
                pl.BlockSpec((tr, W), lambda i: (i, 0)),
            ],
            out_specs=pl.BlockSpec((tr, sWs), lambda i: (i, 0)),
        ),
        compiler_params=pltpu.CompilerParams(
            dimension_semantics=("parallel",),
            vmem_limit_bytes=32 * 1024 * 1024,
        ),
        cost_estimate=cost,
    )(repl, x2d)

    # (N*C*H, s*s*W) -> (N, C, s*H, s*W) is a free, contiguous reshape.
    return out2d.reshape(N, C, Hs, Ws)


class Upsample:
    """JAX/Pallas equivalent of Upsample(scale_factor, mode='nearest')."""

    def __init__(self, scale_factor=1, mode: str = "nearest"):
        assert mode == "nearest", "only nearest mode is implemented"
        self.scale_factor = scale_factor
        self.mode = mode

    def __call__(self, x):
        return upsample_nearest(x, self.scale_factor)


# ----------------------------------- Route ------------------------------------


def _route_kernel(x1_ref, x2_ref, o_ref):
    c2 = x2_ref.shape[1]
    o_ref[:, :c2, :, :] = x2_ref[...]
    o_ref[:, c2:, :, :] = x1_ref[...]


def route_concat(x1: jax.Array, x2: jax.Array) -> jax.Array:
    """torch.cat((x2, x1), dim=1) for NCHW tensors (x2's channels first)."""
    if (x1.ndim != 4 or x2.ndim != 4 or x1.dtype != x2.dtype
            or x1.shape[0] != x2.shape[0] or x1.shape[2:] != x2.shape[2:]):
        return jnp.concatenate((x2, x1), axis=1)

    N, C1, H, W = x1.shape
    C2 = x2.shape[1]
    itemsize = jnp.dtype(x1.dtype).itemsize
    block_bytes = 4 * (C1 + C2) * H * W * itemsize   # in1+in2+out, double-buffered
    if block_bytes > 20 * 1024 * 1024:
        # TODO(synk): very large per-image feature maps fall back to XLA's
        # concatenate (itself a single optimal DMA).
        return jnp.concatenate((x2, x1), axis=1)

    cost = pl.CostEstimate(
        flops=0, transcendentals=0,
        bytes_accessed=int(2 * N * (C1 + C2) * H * W * itemsize),
    )
    return pl.pallas_call(
        _route_kernel,
        out_shape=jax.ShapeDtypeStruct((N, C2 + C1, H, W), x1.dtype),
        grid_spec=pltpu.PrefetchScalarGridSpec(
            num_scalar_prefetch=0,
            grid=(N,),
            in_specs=[
                pl.BlockSpec((1, C1, H, W), lambda n: (n, 0, 0, 0)),
                pl.BlockSpec((1, C2, H, W), lambda n: (n, 0, 0, 0)),
            ],
            out_specs=pl.BlockSpec((1, C2 + C1, H, W), lambda n: (n, 0, 0, 0)),
        ),
        compiler_params=pltpu.CompilerParams(
            dimension_semantics=("parallel",),
            vmem_limit_bytes=32 * 1024 * 1024,
        ),
        cost_estimate=cost,
    )(x1, x2)


class Route:
    """torch.cat((x2, x1), dim=1) for NCHW tensors."""

    def __call__(self, x1, x2):
        return route_concat(x1, x2)


# ----------------------------------- Test -------------------------------------

if __name__ == "__main__":
    key = jax.random.PRNGKey(0)
    k0, k1, k2 = jax.random.split(key, 3)

    # Small conv01up-like feature map; GGHL's neck upsamples by 2.
    x = jax.random.normal(k0, (2, 4, 16, 16), dtype=jnp.float32)

    up = Upsample(scale_factor=2, mode="nearest")
    out = jax.block_until_ready(up(x))
    ref = jnp.repeat(jnp.repeat(x, 2, axis=2), 2, axis=3)
    assert out.shape == (2, 4, 32, 32), out.shape
    assert out.dtype == x.dtype
    assert jnp.array_equal(out, ref), "upsample mismatch (16x16 f32)"

    # Odd GGHL-like spatial size (13x13) exercises non-(8,128)-aligned planes.
    y = jax.random.normal(k1, (1, 3, 13, 13), dtype=jnp.float32)
    out_y = jax.block_until_ready(upsample_nearest(y, 2))
    ref_y = jnp.repeat(jnp.repeat(y, 2, axis=2), 2, axis=3)
    assert out_y.shape == (1, 3, 26, 26)
    assert jnp.array_equal(out_y, ref_y), "upsample mismatch (13x13)"

    # bf16 path (single bf16 replication matmul, exact).
    xb = x.astype(jnp.bfloat16)
    out_b = jax.block_until_ready(upsample_nearest(xb, 2))
    ref_b = jnp.repeat(jnp.repeat(xb, 2, axis=2), 2, axis=3)
    assert out_b.dtype == jnp.bfloat16
    assert jnp.array_equal(out_b, ref_b), "upsample mismatch (bf16)"

    # scale_factor=1 path is a no-op short-circuit.
    out1 = jax.block_until_ready(Upsample(scale_factor=1)(x))
    assert jnp.array_equal(out1, x)

    # Route: torch.cat((x2, x1), dim=1).  x1 is the lateral feature at the
    # upsampled resolution; x2 is the upsample output (same N, H, W).
    x1_feat = jax.random.normal(k2, (2, 6, 32, 32), dtype=jnp.float32)
    r = Route()
    cat = jax.block_until_ready(r(x1_feat, out))
    cat_ref = jnp.concatenate((out, x1_feat), axis=1)
    assert cat.shape == (2, 10, 32, 32), cat.shape
    assert jnp.array_equal(cat, cat_ref), "route mismatch"

    print("KERNEL_OK")
</pallas_src>

<mosaic_0001>
module attributes {stable_mosaic.version = 11 : i64} {
  func.func @_upsample_kernel(%arg0: i32, %arg1: memref<16x64xbf16, #tpu.memory_space<vmem>>, %arg2: memref<32x16xf32, #tpu.memory_space<vmem>>, %arg3: memref<32x64xf32, #tpu.memory_space<vmem>>) attributes {dimension_semantics = [#tpu.dimension_semantics<parallel>], iteration_bounds = array<i64: 4>, scalar_prefetch = 0 : i64, scratch_operands = 0 : i64, tpu.core_type = #tpu.core_type<tc>, window_params = [{pipeline_mode = #tpu.pipeline_mode<synchronous>, transform_indices = @transform_0, window_bounds = array<i64: 16, 64>}, {transform_indices = @transform_1, window_bounds = array<i64: 32, 16>}, {transform_indices = @transform_2, window_bounds = array<i64: 32, 64>}]} {
    %c0 = arith.constant 0 : index
    %c0_0 = arith.constant 0 : index
    %0 = vector.load %arg1[%c0, %c0_0] : memref<16x64xbf16, #tpu.memory_space<vmem>>, vector<16x64xbf16>
    %c0_1 = arith.constant 0 : index
    %c0_2 = arith.constant 0 : index
    %1 = vector.load %arg2[%c0_1, %c0_2] : memref<32x16xf32, #tpu.memory_space<vmem>>, vector<32x16xf32>
    %2 = arith.truncf %1 : vector<32x16xf32> to vector<32x16xbf16>
    %3 = arith.extf %2 : vector<32x16xbf16> to vector<32x16xf32>
    %4 = arith.subf %1, %3 : vector<32x16xf32>
    %cst = arith.constant dense<0.000000e+00> : vector<32x64xf32>
    %5 = tpu.matmul %2, %0, %cst {dimension_numbers = #tpu.dot_dimension_numbers<[1], [0], [0], [1], [0, 0, 1, 1], [], []>} : vector<32x16xbf16>, vector<16x64xbf16>, vector<32x64xf32> -> vector<32x64xf32>
    %6 = arith.truncf %4 : vector<32x16xf32> to vector<32x16xbf16>
    %7 = arith.extf %6 : vector<32x16xbf16> to vector<32x16xf32>
    %8 = arith.subf %4, %7 : vector<32x16xf32>
    %cst_3 = arith.constant dense<0.000000e+00> : vector<32x64xf32>
    %9 = tpu.matmul %6, %0, %cst_3 {dimension_numbers = #tpu.dot_dimension_numbers<[1], [0], [0], [1], [0, 0, 1, 1], [], []>} : vector<32x16xbf16>, vector<16x64xbf16>, vector<32x64xf32> -> vector<32x64xf32>
    %10 = arith.addf %5, %9 : vector<32x64xf32>
    %11 = arith.truncf %8 : vector<32x16xf32> to vector<32x16xbf16>
    %cst_4 = arith.constant dense<0.000000e+00> : vector<32x64xf32>
    %12 = tpu.matmul %11, %0, %cst_4 {dimension_numbers = #tpu.dot_dimension_numbers<[1], [0], [0], [1], [0, 0, 1, 1], [], []>} : vector<32x16xbf16>, vector<16x64xbf16>, vector<32x64xf32> -> vector<32x64xf32>
    %13 = arith.addf %10, %12 : vector<32x64xf32>
    %c0_5 = arith.constant 0 : index
    %c0_6 = arith.constant 0 : index
    %14 = vector.load %arg3[%c0_5, %c0_6] : memref<32x64xf32, #tpu.memory_space<vmem>>, vector<32x64xf32>
    tpu.vector_store %arg3[%c0_5, %c0_6], %13 {strides = array<i32>} : memref<32x64xf32, #tpu.memory_space<vmem>>, vector<32x64xf32>,
    return
  }
  func.func @transform_0(%arg0: i32) -> (i32, i32) {
    %c0_i32 = arith.constant 0 : i32
    %c0_i32_0 = arith.constant 0 : i32
    %c0_i32_1 = arith.constant 0 : i32
    return %c0_i32, %c0_i32_0 : i32, i32
  }
  func.func @transform_1(%arg0: i32) -> (i32, i32) {
    %c0_i32 = arith.constant 0 : i32
    %c0_i32_0 = arith.constant 0 : i32
    return %arg0, %c0_i32 : i32, i32
  }
  func.func @transform_2(%arg0: i32) -> (i32, i32) {
    %c0_i32 = arith.constant 0 : i32
    %c0_i32_0 = arith.constant 0 : i32
    return %arg0, %c0_i32 : i32, i32
  }
}

</mosaic_0001>

<llo_original>
// kernel: tpu_custom_call.1
$region0: #{tpu_custom_call.1}
  #allocation0 [shape = 'u32[]', space=smem, size = 0x4, offset = 0x4, fixed_abs, tag = 'smem constant byte address 0x4 - core index']
  #allocation1 [shape = 'u32[144,128]{1,0:T(1,128)}', space=vmem, size = 0x12000, scoped, tag = 'internal scratch']
  %s0 = inlined_call_operand.vmem [shape: bf16[16,64], index: 0, kind: input, shape index: {}]
  %s1 = inlined_call_operand.vmem [shape: f32[128,16], index: 1, kind: input, shape index: {}]
  %s2 = inlined_call_operand.vmem [shape: f32[128,64], index: 2, kind: output, shape index: {}]
  %s3 = sld [smem:[#allocation0]]
  $region41: #{tpu_custom_call.1} parent=0
    _
  %s5 = ssub.s32 1, %s3
  %s6 = scalar_select 0, %s5, %s3
  loop: start=0, step=1, limit=6
  $region2: #{tpu_custom_call.1} parent=0 // loop_pre_header
    _
  $region3: #{tpu_custom_call.1} parent=0 // loop_header
    %s8 = sphi 0, %s12
    %p9 = scmp.ge.s32.totalorder %s8, 6
    %s16 = sphi 0, %s16
    %s18 = sphi 0, %s16
    %s19 = sphi 0, %s18
    %s33 = sphi 0, %s19
    %s39 = sphi 0, %s41
    %s42 = sphi 0, %s39
    %s43 = sphi 0, %s42
    %s59 = sphi 0, %s43
    %s65 = sphi 0, %s67
    %s68 = sphi 0, %s65
    %s69 = sphi 0, %s68
    %s85 = sphi 0, %s69
  $region4: #{tpu_custom_call.1} parent=0 // loop_header_branch
    %11 = sbr.rel (%p9) target = $region8
  $region5: #{tpu_custom_call.1} parent=0 // loop_body
    %s13 = ssub.s32 %s8, 1
    %s14 = ssub.s32 %s8, 2
    %s15 = sadd.s32 %s8, 1
    %s17 = sadd.s32 %s16, 1
    %p20 = scmp.eq.s32.totalorder %s8, 3
    %p21 = scmp.ne.s32.totalorder %s16, %s18
    %p22 = scmp.eq.s32.totalorder %s8, 0
    %p23 = por %p21, %p22
    %p24 = scmp.ne.s32.totalorder %s16, %s18
    %p25 = scmp.eq.s32.totalorder %s13, 3
    %p26 = por %p24, %p25
    %p27 = scmp.ne.s32.totalorder %s18, %s19
    %p28 = scmp.eq.s32.totalorder %s13, 0
    %p29 = por %p27, %p28
    %p30 = scmp.ne.s32.totalorder %s18, %s19
    %p31 = scmp.eq.s32.totalorder %s14, 3
    %p32 = por %p30, %p31
    %p34 = scmp.ne.s32.totalorder %s19, %s33
    %p35 = scmp.eq.s32.totalorder %s14, 0
    %p36 = por %p34, %p35
    %s37 = ssub.s32 %s8, %s15
    %p38 = scmp.eq.s32.totalorder %s37, 0
    %s40 = sadd.s32 %s39, 1
    %s41 = scalar_select %p38, %s39, %s40
    %p44 = pneg %p38
    %p45 = scmp.eq.s32.totalorder %s8, 3
    %p46 = por %p44, %p45
    %p47 = scmp.ne.s32.totalorder %s39, %s42
    %p48 = scmp.eq.s32.totalorder %s8, 0
    %p49 = por %p47, %p48
    %p50 = scmp.ne.s32.totalorder %s39, %s42
    %p51 = scmp.eq.s32.totalorder %s13, 3
    %p52 = por %p50, %p51
    %p53 = scmp.ne.s32.totalorder %s42, %s43
    %p54 = scmp.eq.s32.totalorder %s13, 0
    %p55 = por %p53, %p54
    %p56 = scmp.ne.s32.totalorder %s42, %s43
    %p57 = scmp.eq.s32.totalorder %s14, 3
    %p58 = por %p56, %p57
    %p60 = scmp.ne.s32.totalorder %s43, %s59
    %p61 = scmp.eq.s32.totalorder %s14, 0
    %p62 = por %p60, %p61
    %s63 = ssub.s32 %s8, %s15
    %p64 = scmp.eq.s32.totalorder %s63, 0
    %s66 = sadd.s32 %s65, 1
    %s67 = scalar_select %p64, %s65, %s66
    %p70 = pneg %p64
    %p71 = scmp.eq.s32.totalorder %s8, 3
    %p72 = por %p70, %p71
    %p73 = scmp.ne.s32.totalorder %s65, %s68
    %p74 = scmp.eq.s32.totalorder %s8, 0
    %p75 = por %p73, %p74
    %p76 = scmp.ne.s32.totalorder %s65, %s68
    %p77 = scmp.eq.s32.totalorder %s13, 3
    %p78 = por %p76, %p77
    %p79 = scmp.ne.s32.totalorder %s68, %s69
    %p80 = scmp.eq.s32.totalorder %s13, 0
    %p81 = por %p79, %p80
    %p82 = scmp.ne.s32.totalorder %s68, %s69
    %p83 = scmp.eq.s32.totalorder %s14, 3
    %p84 = por %p82, %p83
    %p86 = scmp.ne.s32.totalorder %s69, %s85
    %p87 = scmp.eq.s32.totalorder %s14, 0
    %p88 = por %p86, %p87
    %p89 = scmp.le.s32.totalorder 1, %s8
    %p90 = scmp.lt.s32.totalorder %s8, 5
    %p91 = pnand %p89, %p90
    %p92 = pneg %p91
    // Predicated region
    $region9: #{tpu_custom_call.1} parent=5 // pred_check
      _
    $region10: #{tpu_custom_call.1} parent=5 // pred_check_branch
      %94 = sbr.rel (%p91) target = $region12
    $region11: #{tpu_custom_call.1} parent=5 // pred_region
      %s95 = ssub.s32 %s8, 1
      // Predicated region
      $region13: #{tpu_custom_call.1} parent=11 // pred_check
        %p96 = pneg %p29
      $region14: #{tpu_custom_call.1} parent=11 // pred_check_branch
        %98 = sbr.rel (%p96) target = $region16
      $region15: #{tpu_custom_call.1} parent=11 // pred_region
        _
      $region16: #{tpu_custom_call.1} parent=11 // pred_fallthru
        _
    $region12: #{tpu_custom_call.1} parent=5 // pred_fallthru
      _
    %p99 = scmp.lt.s32.totalorder %s8, 4
    // Predicated region
    $region17: #{tpu_custom_call.1} parent=5 // pred_check
      %p100 = pneg %p99
    $region18: #{tpu_custom_call.1} parent=5 // pred_check_branch
      %102 = sbr.rel (%p100) target = $region20
    $region19: #{tpu_custom_call.1} parent=5 // pred_region
      // Predicated region
      $region21: #{tpu_custom_call.1} parent=19 // pred_check
        %p103 = pneg %p49
      $region22: #{tpu_custom_call.1} parent=19 // pred_check_branch
        %105 = sbr.rel (%p103) target = $region24
      $region23: #{tpu_custom_call.1} parent=19 // pred_region
        %s106 = smul.u32 4, %s8
        %p107 = scmp.lt.s32.totalorder %s106, 15
        %s108 = scalar_select %p107, %s106, 15
        %s109 = smul.addr %s108, 8
        %s110 = scalar_lea.vmem %s1, %s109
        %s111 = smul.u32 4, %s8
      $region24: #{tpu_custom_call.1} parent=19 // pred_fallthru
        _
    $region20: #{tpu_custom_call.1} parent=5 // pred_fallthru
      _
    %p112 = scmp.le.s32.totalorder 1, %s8
    %p113 = scmp.lt.s32.totalorder %s8, 5
    %p114 = pnand %p112, %p113
    %p115 = pneg %p114
    // Predicated region
    $region25: #{tpu_custom_call.1} parent=5 // pred_check
      _
    $region26: #{tpu_custom_call.1} parent=5 // pred_check_branch
      %117 = sbr.rel (%p114) target = $region28
    $region27: #{tpu_custom_call.1} parent=5 // pred_region
      %s118 = ssub.s32 %s8, 1
      %p119 = pneg %p29
      %p120 = pneg %p26
      %s121 = smul.u32 4, %s13
      %p122 = scmp.lt.s32.totalorder %s121, 15
      %s123 = scalar_select %p122, %s121, 15
      %s124 = smul.addr %s123, 8
      %s125 = scalar_lea.vmem %s1, %s124
      %p126 = pneg %p55
      %p127 = pneg %p52
      %p128 = pneg %p81
      %p129 = pneg %p78
      %s130 = smul.u32 4, %s13
      %p131 = scmp.lt.s32.totalorder %s130, 15
      %s132 = scalar_select %p131, %s130, 15
      %s133 = smul.addr %s132, 8
      %s134 = scalar_lea.vmem %s2, %s133
      %s135 = smul.u32 4, %s13
      %p136 = scmp.lt.s32.totalorder %s135, 15
      %s137 = scalar_select %p136, %s135, 15
      %s138 = smul.addr %s137, 8
      %s139 = scalar_lea.vmem %s1, %s138
      %s140 = smul.u32 4, %s13
      %s141 = smul.u32 4, %s13
      %p142 = scmp.lt.s32.totalorder %s141, 15
      %s143 = scalar_select %p142, %s141, 15
      %s144 = smul.addr %s143, 8
      %s145 = scalar_lea.vmem %s2, %s144
      %s146 = smul.u32 4, %s13
      %v148 = vld [vmem:[%s0] sm:$0xf]
      %v149 = vld [vmem:[%s0 + $0x4] sm:$0xf]
      %v150 = vld [vmem:[%s139] sm:$0xff]
      %v151 = vld [vmem:[%s139 + $0x8] sm:$0xff]
      %v152 = vld [vmem:[%s139 + $0x10] sm:$0xff]
      %v153 = vld [vmem:[%s139 + $0x18] sm:$0xff]
      %v154 = vpack.c.bf16 %v151, %v150
      %v155 = vpack.c.bf16 %v153, %v152
      %v156 = vunpack.c.l.bf16 %v154
      %v157 = vunpack.c.h.bf16 %v154
      %v158 = vunpack.c.l.bf16 %v155
      %v159 = vunpack.c.h.bf16 %v155
      %v160 = vsub.f32 %v150, %v156
      %v161 = vsub.f32 %v151, %v157
      %v162 = vsub.f32 %v152, %v158
      %v163 = vsub.f32 %v153, %v159
      %v164 = vpack.c.bf16 %v161, %v160
      %v165 = vpack.c.bf16 %v163, %v162
      %v166 = vunpack.c.l.bf16 %v164
      %v167 = vunpack.c.h.bf16 %v164
      %v168 = vunpack.c.l.bf16 %v165
      %v169 = vunpack.c.h.bf16 %v165
      %v170 = vsub.f32 %v160, %v166
      %v171 = vsub.f32 %v161, %v167
      %v172 = vsub.f32 %v162, %v168
      %v173 = vsub.f32 %v163, %v169
      %v176 = vunpack.c.l.b16 %v148
      %v177 = vunpack.c.l.b16 %v149
      %v178 = vpack.c.b16 %v177, %v176
      %vm180 = vcmask 130048
      %v182 = vsel %vm180, %v164, 0
      %v185 = vsel %vm180, %v165, 0
      %187 = vmatprep.subr.bf16.mxu0 0
      %188 = vmatpush1.bf16.msra.mxu0 %v178
      %189 = vmatprep.subr.bf16.mxu0 0
      %190 = vmatpush1.bf16.msra.mxu0 0
      %191 = vmatprep.subr.bf16.mxu0 0
      %192 = vmatpush1.bf16.msra.mxu0 0
      %193 = vmatprep.subr.bf16.mxu0 0
      %194 = vmatpush1.bf16.msra.mxu0 0
      %195 = vmatprep.subr.bf16.mxu0 0
      %196 = vmatpush1.bf16.msra.mxu0 0
      %197 = vmatprep.subr.bf16.mxu0 0
      %198 = vmatpush1.bf16.msra.mxu0 0
      %199 = vmatprep.subr.bf16.mxu0 0
      %200 = vmatpush1.bf16.msra.mxu0 0
      %201 = vmatprep.subr.bf16.mxu0 0
      %202 = vmatpush1.bf16.msra.mxu0 0
      %203 = vmatprep.subr.bf16.mxu0 0
      %204 = vmatpush1.bf16.msra.mxu0 0
      %205 = vmatprep.subr.bf16.mxu0 0
      %206 = vmatpush1.bf16.msra.mxu0 0
      %207 = vmatprep.subr.bf16.mxu0 0
      %208 = vmatpush1.bf16.msra.mxu0 0
      %209 = vmatprep.subr.bf16.mxu0 0
      %210 = vmatpush1.bf16.msra.mxu0 0
      %211 = vmatprep.subr.bf16.mxu0 0
      %212 = vmatpush1.bf16.msra.mxu0 0
      %213 = vmatprep.subr.bf16.mxu0 0
      %214 = vmatpush1.bf16.msra.mxu0 0
      %215 = vmatprep.subr.bf16.mxu0 0
      %216 = vmatpush1.bf16.msra.mxu0 0
      %217 = vmatprep.subr.bf16.mxu0 0
      %218 = vmatpush1.bf16.msra.mxu0 0
      %219 = vmatprep.mubr.bf16.mxu0 0
      %220 = vmatmul.mubr.bf16.gmra.mrb[0].mxu0 %v182
      %v221 = vpop.f32.mrb[0].mxu0
      %v222 = vadd.f32 0.0, %v221
      %v223 = vpop.f32.mrb[0].mxu0
      %v224 = vpop.f32.mrb[0].mxu0
      %v225 = vadd.f32 0.0, %v224
      %v226 = vpop.f32.mrb[0].mxu0
      %227 = vmatprep.mubr.bf16.mxu0 0
      %228 = vmatmul.mubr.bf16.gmra.mrb[0].mxu0 %v185
      %v229 = vpop.f32.mrb[0].mxu0
      %v230 = vadd.f32 0.0, %v229
      %v231 = vpop.f32.mrb[0].mxu0
      %v232 = vpop.f32.mrb[0].mxu0
      %v233 = vadd.f32 0.0, %v232
      %v234 = vpop.f32.mrb[0].mxu0
      %235 = vdwg.mxu0
      %v237 = vsel %vm180, %v154, 0
      %v240 = vsel %vm180, %v155, 0
      %242 = vmatprep.subr.bf16.mxu0 0
      %243 = vmatpush1.bf16.msra.mxu0 %v178
      %244 = vmatprep.subr.bf16.mxu0 0
      %245 = vmatpush1.bf16.msra.mxu0 0
      %246 = vmatprep.subr.bf16.mxu0 0
      %247 = vmatpush1.bf16.msra.mxu0 0
      %248 = vmatprep.subr.bf16.mxu0 0
      %249 = vmatpush1.bf16.msra.mxu0 0
      %250 = vmatprep.subr.bf16.mxu0 0
      %251 = vmatpush1.bf16.msra.mxu0 0
      %252 = vmatprep.subr.bf16.mxu0 0
      %253 = vmatpush1.bf16.msra.mxu0 0
      %254 = vmatprep.subr.bf16.mxu0 0
      %255 = vmatpush1.bf16.msra.mxu0 0
      %256 = vmatprep.subr.bf16.mxu0 0
      %257 = vmatpush1.bf16.msra.mxu0 0
      %258 = vmatprep.subr.bf16.mxu0 0
      %259 = vmatpush1.bf16.msra.mxu0 0
      %260 = vmatprep.subr.bf16.mxu0 0
      %261 = vmatpush1.bf16.msra.mxu0 0
      %262 = vmatprep.subr.bf16.mxu0 0
      %263 = vmatpush1.bf16.msra.mxu0 0
      %264 = vmatprep.subr.bf16.mxu0 0
      %265 = vmatpush1.bf16.msra.mxu0 0
      %266 = vmatprep.subr.bf16.mxu0 0
      %267 = vmatpush1.bf16.msra.mxu0 0
      %268 = vmatprep.subr.bf16.mxu0 0
      %269 = vmatpush1.bf16.msra.mxu0 0
      %270 = vmatprep.subr.bf16.mxu0 0
      %271 = vmatpush1.bf16.msra.mxu0 0
      %272 = vmatprep.subr.bf16.mxu0 0
      %273 = vmatpush1.bf16.msra.mxu0 0
      %274 = vmatprep.mubr.bf16.mxu0 0
      %275 = vmatmul.mubr.bf16.gmra.mrb[0].mxu0 %v237
      %v276 = vpop.f32.mrb[0].mxu0
      %v277 = vadd.f32 %v222, %v276
      %v278 = vpop.f32.mrb[0].mxu0
      %v279 = vpop.f32.mrb[0].mxu0
      %v280 = vadd.f32 %v225, %v279
      %v281 = vpop.f32.mrb[0].mxu0
      %282 = vmatprep.mubr.bf16.mxu0 0
      %283 = vmatmul.mubr.bf16.gmra.mrb[0].mxu0 %v240
      %v284 = vpop.f32.mrb[0].mxu0
      %v285 = vadd.f32 %v230, %v284
      %v286 = vpop.f32.mrb[0].mxu0
      %v287 = vpop.f32.mrb[0].mxu0
      %v288 = vadd.f32 %v233, %v287
      %v289 = vpop.f32.mrb[0].mxu0
      %290 = vdwg.mxu0
      %v291 = vpack.c.bf16 %v171, %v170
      %v292 = vpack.c.bf16 %v173, %v172
      %v294 = vsel %vm180, %v291, 0
      %v297 = vsel %vm180, %v292, 0
      %299 = vmatprep.subr.bf16.mxu0 0
      %300 = vmatpush1.bf16.msra.mxu0 %v178
      %301 = vmatprep.subr.bf16.mxu0 0
      %302 = vmatpush1.bf16.msra.mxu0 0
      %303 = vmatprep.subr.bf16.mxu0 0
      %304 = vmatpush1.bf16.msra.mxu0 0
      %305 = vmatprep.subr.bf16.mxu0 0
      %306 = vmatpush1.bf16.msra.mxu0 0
      %307 = vmatprep.subr.bf16.mxu0 0
      %308 = vmatpush1.bf16.msra.mxu0 0
      %309 = vmatprep.subr.bf16.mxu0 0
      %310 = vmatpush1.bf16.msra.mxu0 0
      %311 = vmatprep.subr.bf16.mxu0 0
      %312 = vmatpush1.bf16.msra.mxu0 0
      %313 = vmatprep.subr.bf16.mxu0 0
      %314 = vmatpush1.bf16.msra.mxu0 0
      %315 = vmatprep.subr.bf16.mxu0 0
      %316 = vmatpush1.bf16.msra.mxu0 0
      %317 = vmatprep.subr.bf16.mxu0 0
      %318 = vmatpush1.bf16.msra.mxu0 0
      %319 = vmatprep.subr.bf16.mxu0 0
      %320 = vmatpush1.bf16.msra.mxu0 0
      %321 = vmatprep.subr.bf16.mxu0 0
      %322 = vmatpush1.bf16.msra.mxu0 0
      %323 = vmatprep.subr.bf16.mxu0 0
      %324 = vmatpush1.bf16.msra.mxu0 0
      %325 = vmatprep.subr.bf16.mxu0 0
      %326 = vmatpush1.bf16.msra.mxu0 0
      %327 = vmatprep.subr.bf16.mxu0 0
      %328 = vmatpush1.bf16.msra.mxu0 0
      %329 = vmatprep.subr.bf16.mxu0 0
      %330 = vmatpush1.bf16.msra.mxu0 0
      %331 = vmatprep.mubr.bf16.mxu0 0
      %332 = vmatmul.mubr.bf16.gmra.mrb[0].mxu0 %v294
      %v333 = vpop.f32.mrb[0].mxu0
      %v334 = vadd.f32 0.0, %v333
      %v335 = vpop.f32.mrb[0].mxu0
      %v336 = vpop.f32.mrb[0].mxu0
      %v337 = vadd.f32 0.0, %v336
      %v338 = vpop.f32.mrb[0].mxu0
      %339 = vmatprep.mubr.bf16.mxu0 0
      %340 = vmatmul.mubr.bf16.gmra.mrb[0].mxu0 %v297
      %v341 = vpop.f32.mrb[0].mxu0
      %v342 = vadd.f32 0.0, %v341
      %v343 = vpop.f32.mrb[0].mxu0
      %v344 = vpop.f32.mrb[0].mxu0
      %v345 = vadd.f32 0.0, %v344
      %v346 = vpop.f32.mrb[0].mxu0
      %347 = vdwg.mxu0
      %v348 = vadd.f32 %v277, %v334
      %v349 = vadd.f32 %v280, %v337
      %v350 = vadd.f32 %v285, %v342
      %v351 = vadd.f32 %v288, %v345
      %vm352 = vcmask 523264
      %353 = vst.msk [vmem:[%s145] sm:$0xff] %vm352, %v348
      %354 = vst.msk [vmem:[%s145 + $0x8] sm:$0xff] %vm352, %v349
      %355 = vst.msk [vmem:[%s145 + $0x10] sm:$0xff] %vm352, %v350
      %356 = vst.msk [vmem:[%s145 + $0x18] sm:$0xff] %vm352, %v351
      %s357 = smul.u32 4, %s13
      %p358 = scmp.lt.s32.totalorder %s357, 15
      %s359 = scalar_select %p358, %s357, 15
      %s360 = smul.addr %s359, 8
      %s361 = scalar_lea.vmem %s2, %s360
      // Predicated region
      $region29: #{tpu_custom_call.1} parent=27 // pred_check
        %p362 = pneg %p78
      $region30: #{tpu_custom_call.1} parent=27 // pred_check_branch
        %364 = sbr.rel (%p362) target = $region32
      $region31: #{tpu_custom_call.1} parent=27 // pred_region
        %s365 = smul.u32 4, %s13
      $region32: #{tpu_custom_call.1} parent=27 // pred_fallthru
        _
    $region28: #{tpu_custom_call.1} parent=5 // pred_fallthru
      _
    %p366 = scmp.le.s32.totalorder 2, %s8
    // Predicated region
    $region33: #{tpu_custom_call.1} parent=5 // pred_check
      %p367 = pneg %p366
    $region34: #{tpu_custom_call.1} parent=5 // pred_check_branch
      %369 = sbr.rel (%p367) target = $region36
    $region35: #{tpu_custom_call.1} parent=5 // pred_region
      %s370 = ssub.s32 %s8, 2
      // Predicated region
      $region37: #{tpu_custom_call.1} parent=35 // pred_check
        %p371 = pneg %p84
      $region38: #{tpu_custom_call.1} parent=35 // pred_check_branch
        %373 = sbr.rel (%p371) target = $region40
      $region39: #{tpu_custom_call.1} parent=35 // pred_region
        %s374 = smul.u32 4, %s14
        %p375 = scmp.lt.s32.totalorder %s374, 15
        %s376 = scalar_select %p375, %s374, 15
        %s377 = smul.addr %s376, 8
        %s378 = scalar_lea.vmem %s2, %s377
      $region40: #{tpu_custom_call.1} parent=35 // pred_fallthru
        _
    $region36: #{tpu_custom_call.1} parent=5 // pred_fallthru
      _
  $region6: #{tpu_custom_call.1} parent=0 // loop_footer
    %s12 = sadd.s32 1, %s8
  $region7: #{tpu_custom_call.1} parent=0 // loop_footer_branch
    %7 = sbr.rel target = $region3
  $region8: #{tpu_custom_call.1} parent=0 // loop_exit
    _

</llo_original>
